<compile_context>
chip_gen: v6e
topology: v6e:2x2x1
jax: 0.10.0
libtpu: 0.0.40
codegen_flags: <defaults>
</compile_context>

<pallas_src>
import math

import jax
import jax.numpy as jnp
import numpy as np
from jax.experimental import pallas as pl
from jax.experimental.pallas import tpu as pltpu


def _round_up(x: int, m: int) -> int:
    return ((x + m - 1) // m) * m


def _vmem_cap_limit_bytes() -> int:
    """Generation-aware ceiling for the scoped VMEM limit (with headroom)."""
    try:
        cap = int(pltpu.get_tpu_info().vmem_capacity_bytes)
    except Exception:
        cap = 64 * 1024 * 1024  # conservative fallback: assume v7x (64 MiB / TC)
    # Leave ~16 MiB headroom for compiler-internal scratch; never ask for >100 MiB.
    return int(min(cap - 16 * 1024 * 1024, 100 * 1024 * 1024))


# -----------------------------------------------------------------------------
# Kernel 1: support = x @ W   (tiny relative to adj @ support, row-parallel)
# -----------------------------------------------------------------------------
def _support_kernel(x_ref, w_ref, o_ref):
    o_ref[...] = jnp.dot(
        x_ref[...], w_ref[...], preferred_element_type=jnp.float32
    ).astype(o_ref.dtype)


def _compute_support(x_pad, w_pad, *, block_rows, out_dtype, vmem_cap):
    n_pad, f_in = x_pad.shape
    f_out_pad = w_pad.shape[1]
    out_itemsize = jnp.dtype(out_dtype).itemsize

    bs = block_rows

    def footprint(b):
        return (
            2 * b * f_in * 4               # x tiles (double-buffered)
            + 2 * f_in * f_out_pad * 4     # resident W (budgeted 2x, safe)
            + 2 * b * f_out_pad * out_itemsize  # output tiles
        )

    # Shrink the row block if a very wide f_in would blow the VMEM budget (v7x).
    while footprint(bs) > vmem_cap and bs % 16 == 0 and n_pad % (bs // 2) == 0:
        bs //= 2

    vmem_limit = int(min(max(footprint(bs) + (4 << 20), 32 << 20), vmem_cap))

    return pl.pallas_call(
        _support_kernel,
        out_shape=jax.ShapeDtypeStruct((n_pad, f_out_pad), out_dtype),
        grid_spec=pltpu.PrefetchScalarGridSpec(
            num_scalar_prefetch=0,
            grid=(n_pad // bs,),
            in_specs=[
                pl.BlockSpec((bs, f_in), lambda i: (i, 0)),
                pl.BlockSpec((f_in, f_out_pad), lambda i: (0, 0)),
            ],
            out_specs=pl.BlockSpec((bs, f_out_pad), lambda i: (i, 0)),
        ),
        compiler_params=pltpu.CompilerParams(
            dimension_semantics=("parallel",),
            vmem_limit_bytes=vmem_limit,
        ),
        cost_estimate=pl.CostEstimate(
            flops=2 * n_pad * f_in * f_out_pad,
            transcendentals=0,
            bytes_accessed=(
                4 * n_pad * f_in
                + 4 * f_in * f_out_pad
                + out_itemsize * n_pad * f_out_pad
            ),
        ),
    )(x_pad, w_pad)


# -----------------------------------------------------------------------------
# Kernel 2: out = adj @ support + bias   (row-parallel, K-tiled reduction,
#            accumulation directly into the resident f32 output block)
# -----------------------------------------------------------------------------
def _make_aggregate_kernel(block_k, support_resident):
    def kernel(adj_ref, s_ref, b_ref, o_ref):
        k = pl.program_id(1)

        @pl.when(k == 0)
        def _():
            o_ref[...] = jnp.zeros_like(o_ref)

        if support_resident:
            start = pl.multiple_of(k * block_k, block_k)
            s_blk = s_ref[pl.ds(start, block_k), :]
        else:
            s_blk = s_ref[...]

        o_ref[...] += jnp.dot(
            adj_ref[...], s_blk, preferred_element_type=jnp.float32
        )

        @pl.when(k == pl.num_programs(1) - 1)
        def _():
            o_ref[...] += b_ref[...]

    return kernel


def _aggregate(adj_pad, support, bias_pad, *, block_rows, block_k, vmem_cap):
    n_rows_pad, n_k_pad = adj_pad.shape
    f_out_pad = support.shape[1]
    c_itemsize = jnp.dtype(adj_pad.dtype).itemsize

    adj_tiles = 2 * block_rows * block_k * c_itemsize       # double-buffered adj
    out_tiles = 2 * block_rows * f_out_pad * 4               # f32 output tiles
    bias_tiles = 2 * f_out_pad * 4
    support_full = n_k_pad * f_out_pad * c_itemsize

    # Keep support fully VMEM-resident (constant index_map -> DMA'd once) when it
    # fits; otherwise stream (block_k, f_out_pad) tiles along the reduction axis.
    resident = (
        2 * support_full + adj_tiles + out_tiles + bias_tiles + (4 << 20)
    ) <= vmem_cap

    if resident:
        support_spec = pl.BlockSpec((n_k_pad, f_out_pad), lambda i, k: (0, 0))
        support_vmem = 2 * support_full
        support_hbm = support_full
    else:
        support_spec = pl.BlockSpec((block_k, f_out_pad), lambda i, k: (k, 0))
        support_vmem = 2 * block_k * f_out_pad * c_itemsize
        support_hbm = (n_rows_pad // block_rows) * n_k_pad * f_out_pad * c_itemsize

    footprint = adj_tiles + out_tiles + bias_tiles + support_vmem
    vmem_limit = int(min(max(footprint + (8 << 20), 32 << 20), vmem_cap))

    kernel = _make_aggregate_kernel(block_k, resident)

    return pl.pallas_call(
        kernel,
        out_shape=jax.ShapeDtypeStruct((n_rows_pad, f_out_pad), jnp.float32),
        grid_spec=pltpu.PrefetchScalarGridSpec(
            num_scalar_prefetch=0,
            grid=(n_rows_pad // block_rows, n_k_pad // block_k),  # reduction last
            in_specs=[
                pl.BlockSpec((block_rows, block_k), lambda i, k: (i, k)),  # adj
                support_spec,                                              # support
                pl.BlockSpec((1, f_out_pad), lambda i, k: (0, 0)),         # bias
            ],
            out_specs=pl.BlockSpec((block_rows, f_out_pad), lambda i, k: (i, 0)),
        ),
        compiler_params=pltpu.CompilerParams(
            dimension_semantics=("parallel", "arbitrary"),
            vmem_limit_bytes=vmem_limit,
        ),
        cost_estimate=pl.CostEstimate(
            flops=2 * n_rows_pad * n_k_pad * f_out_pad,
            transcendentals=0,
            bytes_accessed=(
                c_itemsize * n_rows_pad * n_k_pad
                + support_hbm
                + 4 * n_rows_pad * f_out_pad
                + 4 * f_out_pad
            ),
        ),
    )(adj_pad, support, bias_pad)


# -----------------------------------------------------------------------------
# Wrapper: GraphConvolution.forward
# -----------------------------------------------------------------------------
def graph_convolution(
    x,
    adj,
    weight,
    bias=None,
    *,
    compute_dtype=jnp.bfloat16,   # bf16 feed for adj/support; f32 MXU accumulation
    block_rows=None,              # default 2048 (bf16) / 1024 (f32)
    block_k=1024,
):
    """GCN layer forward: adj @ (x @ weight) + bias.

    x: (N, F_in), adj: (N, N) dense row-normalized adjacency,
    weight: (F_in, F_out), bias: (F_out,) or None. Output is float32 (N, F_out).
    """
    N, f_in = x.shape
    f_out = weight.shape[1]
    assert adj.shape == (N, N)

    f32 = jnp.float32
    compute_dtype = jnp.dtype(compute_dtype)
    c_itemsize = compute_dtype.itemsize
    vmem_cap = _vmem_cap_limit_bytes()

    # Lane-dense support/output: pad F_out to a multiple of 128 (sliced back below).
    f_out_pad = _round_up(max(f_out, 128), 128)

    n8 = _round_up(N, 8)

    # Contraction-dim tile: 128-aligned lane dim of adj unless it covers all of N.
    bk = min(block_k, n8)
    if bk < n8:
        bk = _round_up(bk, 128)
    n_k_pad = _round_up(N, bk)

    # Row tile: bigger when adj is narrow (bf16); ensure >= 2 row blocks when
    # possible so both v7x TensorCores get work.
    if block_rows is None:
        block_rows = 2048 if c_itemsize <= 2 else 1024
    bm = min(block_rows, n8)
    if bm == n8 and n8 >= 16:
        bm = _round_up((n8 + 1) // 2, 8)
    n_rows_pad = _round_up(N, bm)

    # --- Build padded/cast inputs, skipping any work that is not needed -------
    x_c = x if x.dtype == f32 else x.astype(f32)
    if n_k_pad != N:
        x_pad = jnp.zeros((n_k_pad, f_in), f32).at[:N, :].set(x_c)
    else:
        x_pad = x_c

    w_c = weight if weight.dtype == f32 else weight.astype(f32)
    if f_out_pad != f_out:
        w_pad = jnp.zeros((f_in, f_out_pad), f32).at[:, :f_out].set(w_c)
    else:
        w_pad = w_c

    if (n_rows_pad, n_k_pad) == (N, N):
        adj_pad = adj if adj.dtype == compute_dtype else adj.astype(compute_dtype)
    else:
        # Single pad+cast pass, built directly in compute_dtype.
        adj_pad = jnp.zeros((n_rows_pad, n_k_pad), compute_dtype).at[:N, :N].set(
            adj.astype(compute_dtype)
        )

    b = bias if bias is not None else jnp.zeros((f_out,), f32)
    bias_pad = jnp.zeros((1, f_out_pad), f32).at[0, :f_out].set(b.astype(f32))

    support = _compute_support(
        x_pad, w_pad, block_rows=bk, out_dtype=compute_dtype, vmem_cap=vmem_cap
    )
    out_pad = _aggregate(
        adj_pad, support, bias_pad, block_rows=bm, block_k=bk, vmem_cap=vmem_cap
    )
    return out_pad[:N, :f_out]


if __name__ == "__main__":
    key = jax.random.PRNGKey(0)
    k_x, k_adj, k_w = jax.random.split(key, 3)

    # Small shapes: N nodes, in/out feature dims (GraphConvolution(in_features, out_features)).
    N, in_features, out_features = 64, 32, 16

    # Node features.
    x = jax.random.normal(k_x, (N, in_features), dtype=jnp.float32)

    # Dense symmetric adjacency with self loops, row-normalized (typical GCN input).
    a = (jax.random.uniform(k_adj, (N, N)) < 0.1).astype(jnp.float32)
    a = jnp.maximum(a, a.T) + jnp.eye(N, dtype=jnp.float32)
    adj = a / jnp.sum(a, axis=1, keepdims=True)

    # Parameters: xavier_normal_ weight (std = sqrt(2/(fan_in+fan_out))), zero bias.
    std = math.sqrt(2.0 / (in_features + out_features))
    weight = std * jax.random.normal(
        k_w, (in_features, out_features), dtype=jnp.float32
    )
    bias = jnp.zeros((out_features,), dtype=jnp.float32)

    # float64 host reference.
    x64 = np.asarray(x, np.float64)
    adj64 = np.asarray(adj, np.float64)
    w64 = np.asarray(weight, np.float64)
    b64 = np.asarray(bias, np.float64)
    ref = adj64 @ (x64 @ w64) + b64[None, :]

    # Default path: bf16-fed aggregation (f32 accumulation) — halves adj HBM bytes.
    out_bf16 = jax.block_until_ready(graph_convolution(x, adj, weight, bias))
    assert out_bf16.shape == (N, out_features)
    assert np.allclose(np.asarray(out_bf16, np.float64), ref, atol=3e-2, rtol=3e-2), (
        "bf16 kernel mismatch vs reference"
    )

    # Full f32 path (matches the torch FloatTensor forward); tighter tolerance.
    out_f32 = jax.block_until_ready(
        graph_convolution(x, adj, weight, bias, compute_dtype=jnp.float32)
    )
    assert out_f32.shape == (N, out_features)
    assert np.allclose(np.asarray(out_f32, np.float64), ref, atol=5e-3, rtol=5e-3), (
        "f32 kernel mismatch vs reference"
    )

    print("KERNEL_OK")
</pallas_src>

<mosaic_0001>
module attributes {stable_mosaic.version = 11 : i64} {
  func.func @_support_kernel(%arg0: i32, %arg1: memref<64x32xf32, #tpu.memory_space<vmem>>, %arg2: memref<32x128xf32, #tpu.memory_space<vmem>>, %arg3: memref<64x128xbf16, #tpu.memory_space<vmem>>) attributes {dimension_semantics = [#tpu.dimension_semantics<parallel>], iteration_bounds = array<i64: 1>, scalar_prefetch = 0 : i64, scratch_operands = 0 : i64, tpu.core_type = #tpu.core_type<tc>, window_params = [{transform_indices = @transform_0, window_bounds = array<i64: 64, 32>}, {pipeline_mode = #tpu.pipeline_mode<synchronous>, transform_indices = @transform_1, window_bounds = array<i64: 32, 128>}, {transform_indices = @transform_2, window_bounds = array<i64: 64, 128>}]} {
    %c0 = arith.constant 0 : index
    %c0_0 = arith.constant 0 : index
    %0 = vector.load %arg1[%c0, %c0_0] : memref<64x32xf32, #tpu.memory_space<vmem>>, vector<64x32xf32>
    %c0_1 = arith.constant 0 : index
    %c0_2 = arith.constant 0 : index
    %1 = vector.load %arg2[%c0_1, %c0_2] : memref<32x128xf32, #tpu.memory_space<vmem>>, vector<32x128xf32>
    %cst = arith.constant dense<0.000000e+00> : vector<64x128xf32>
    %2 = tpu.matmul %0, %1, %cst {dimension_numbers = #tpu.dot_dimension_numbers<[1], [0], [0], [1], [0, 0, 1, 1], [], []>} : vector<64x32xf32>, vector<32x128xf32>, vector<64x128xf32> -> vector<64x128xf32>
    %3 = arith.truncf %2 : vector<64x128xf32> to vector<64x128xbf16>
    %c0_3 = arith.constant 0 : index
    %c0_4 = arith.constant 0 : index
    %4 = vector.load %arg3[%c0_3, %c0_4] : memref<64x128xbf16, #tpu.memory_space<vmem>>, vector<64x128xbf16>
    tpu.vector_store %arg3[%c0_3, %c0_4], %3 {strides = array<i32>} : memref<64x128xbf16, #tpu.memory_space<vmem>>, vector<64x128xbf16>,
    return
  }
  func.func @transform_0(%arg0: i32) -> (i32, i32) {
    %c0_i32 = arith.constant 0 : i32
    %c0_i32_0 = arith.constant 0 : i32
    return %arg0, %c0_i32 : i32, i32
  }
  func.func @transform_1(%arg0: i32) -> (i32, i32) {
    %c0_i32 = arith.constant 0 : i32
    %c0_i32_0 = arith.constant 0 : i32
    %c0_i32_1 = arith.constant 0 : i32
    return %c0_i32, %c0_i32_0 : i32, i32
  }
  func.func @transform_2(%arg0: i32) -> (i32, i32) {
    %c0_i32 = arith.constant 0 : i32
    %c0_i32_0 = arith.constant 0 : i32
    return %arg0, %c0_i32 : i32, i32
  }
}

</mosaic_0001>

<llo_original>
// kernel: tpu_custom_call.1
$region0: #{tpu_custom_call.1}
  #allocation0 [shape = 'u32[]', space=smem, size = 0x4, offset = 0x4, fixed_abs, tag = 'smem constant byte address 0x4 - core index']
  #allocation1 [shape = 'u32[144,128]{1,0:T(1,128)}', space=vmem, size = 0x12000, scoped, tag = 'internal scratch']
  %s0 = inlined_call_operand.vmem [shape: f32[64,32], index: 0, kind: input, shape index: {}]
  %s1 = inlined_call_operand.vmem [shape: f32[32,128], index: 1, kind: input, shape index: {}]
  %s2 = inlined_call_operand.hbm [shape: bf16[64,128], index: 2, kind: output, shape index: {}]
  %s3 = sld [smem:[#allocation0]]
  $region18: #{tpu_custom_call.1} parent=0
    _
  %s5 = ssub.s32 1, %s3
  %s6 = scalar_select 0, %s5, %s3
  $region1: #{tpu_custom_call.1} parent=0
    #allocation2 [shape = 'u8[16384]{0}', space=vmem, size = 0x4000, scoped, tag = 'output window, operand 0, single buffered']
    #allocation3 [shape = 's32[1]{0}', space=sflag, size = 0x4, scoped, tag = 'scoped memory for tpu_custom_call.1']
    %7 = vsyncpa [#allocation3], 0
    // Predicated region
    $region2: #{tpu_custom_call.1} parent=1 // pred_check
      _
    $region3: #{tpu_custom_call.1} parent=1 // pred_check_branch
      %9 = sbr.rel (0) target = $region5
    $region4: #{tpu_custom_call.1} parent=1 // pred_region
      _
    $region5: #{tpu_custom_call.1} parent=1 // pred_fallthru
      _
    // Predicated region
    $region6: #{tpu_custom_call.1} parent=1 // pred_check
      _
    $region7: #{tpu_custom_call.1} parent=1 // pred_check_branch
      %11 = sbr.rel (0) target = $region9
    $region8: #{tpu_custom_call.1} parent=1 // pred_region
      _
    $region9: #{tpu_custom_call.1} parent=1 // pred_fallthru
      _
    %v12 = vld [vmem:[%s0] sm:$0xff]
    %v13 = vld [vmem:[%s0 + $0x8] sm:$0xff]
    %v14 = vld [vmem:[%s0 + $0x10] sm:$0xff]
    %v15 = vld [vmem:[%s0 + $0x18] sm:$0xff]
    %v16 = vld [vmem:[%s0 + $0x20] sm:$0xff]
    %v17 = vld [vmem:[%s0 + $0x28] sm:$0xff]
    %v18 = vld [vmem:[%s0 + $0x30] sm:$0xff]
    %v19 = vld [vmem:[%s0 + $0x38] sm:$0xff]
    %v20 = vld [vmem:[%s1] sm:$0xff]
    %v21 = vld [vmem:[%s1 + $0x8] sm:$0xff]
    %v22 = vld [vmem:[%s1 + $0x10] sm:$0xff]
    %v23 = vld [vmem:[%s1 + $0x18] sm:$0xff]
    %vm24 = vcmask 261120
    %v26 = vsel %vm24, %v12, 0
    %v29 = vsel %vm24, %v13, 0
    %v32 = vsel %vm24, %v14, 0
    %v35 = vsel %vm24, %v15, 0
    %v38 = vsel %vm24, %v16, 0
    %v41 = vsel %vm24, %v17, 0
    %v44 = vsel %vm24, %v18, 0
    %v47 = vsel %vm24, %v19, 0
    %49 = vmatprep.subr.mxu0 0.0
    %50 = vmatpush1.msra.mxu0 0.0
    %51 = vmatprep.subr.mxu0 0.0
    %52 = vmatpush1.msra.mxu0 0.0
    %53 = vmatprep.subr.mxu0 0.0
    %54 = vmatpush1.msra.mxu0 0.0
    %55 = vmatprep.subr.mxu0 0.0
    %56 = vmatpush1.msra.mxu0 0.0
    %57 = vmatprep.subr.mxu0 0.0
    %58 = vmatpush1.msra.mxu0 0.0
    %59 = vmatprep.subr.mxu0 0.0
    %60 = vmatpush1.msra.mxu0 0.0
    %61 = vmatprep.subr.mxu0 0.0
    %62 = vmatpush1.msra.mxu0 0.0
    %63 = vmatprep.subr.mxu0 0.0
    %64 = vmatpush1.msra.mxu0 0.0
    %65 = vmatprep.subr.mxu0 0.0
    %66 = vmatpush1.msra.mxu0 0.0
    %67 = vmatprep.subr.mxu0 0.0
    %68 = vmatpush1.msra.mxu0 0.0
    %69 = vmatprep.subr.mxu0 0.0
    %70 = vmatpush1.msra.mxu0 0.0
    %71 = vmatprep.subr.mxu0 0.0
    %72 = vmatpush1.msra.mxu0 0.0
    %73 = vmatprep.subr.mxu0 0.0
    %74 = vmatpush1.msra.mxu0 %v23
    %75 = vmatprep.subr.mxu0 0.0
    %76 = vmatpush1.msra.mxu0 %v22
    %77 = vmatprep.subr.mxu0 0.0
    %78 = vmatpush1.msra.mxu0 %v21
    %79 = vmatprep.subr.mxu0 0.0
    %80 = vmatpush1.msra.mxu0 %v20
    %81 = vmatprep.subr.mxu0 0.0
    %82 = vmatpush2.msra.mxu0 0.0
    %83 = vmatprep.subr.mxu0 0.0
    %84 = vmatpush2.msra.mxu0 0.0
    %85 = vmatprep.subr.mxu0 0.0
    %86 = vmatpush2.msra.mxu0 0.0
    %87 = vmatprep.subr.mxu0 0.0
    %88 = vmatpush2.msra.mxu0 0.0
    %89 = vmatprep.subr.mxu0 0.0
    %90 = vmatpush2.msra.mxu0 0.0
    %91 = vmatprep.subr.mxu0 0.0
    %92 = vmatpush2.msra.mxu0 0.0
    %93 = vmatprep.subr.mxu0 0.0
    %94 = vmatpush2.msra.mxu0 0.0
    %95 = vmatprep.subr.mxu0 0.0
    %96 = vmatpush2.msra.mxu0 0.0
    %97 = vmatprep.subr.mxu0 0.0
    %98 = vmatpush2.msra.mxu0 0.0
    %99 = vmatprep.subr.mxu0 0.0
    %100 = vmatpush2.msra.mxu0 0.0
    %101 = vmatprep.subr.mxu0 0.0
    %102 = vmatpush2.msra.mxu0 0.0
    %103 = vmatprep.subr.mxu0 0.0
    %104 = vmatpush2.msra.mxu0 0.0
    %105 = vmatprep.subr.mxu0 0.0
    %106 = vmatpush2.msra.mxu0 0.0
    %107 = vmatprep.subr.mxu0 0.0
    %108 = vmatpush2.msra.mxu0 0.0
    %109 = vmatprep.subr.mxu0 0.0
    %110 = vmatpush2.msra.mxu0 0.0
    %111 = vmatprep.subr.mxu0 0.0
    %112 = vmatpush2.msra.mxu0 0.0
    %113 = vmatprep.mubr.f32.mxu0 0.0
    %114 = vmatmul.mubr.f32.gmra.mxu0 %v26
    %v115 = vpop.f32.mrf.mxu0
    %v116 = vadd.f32 0.0, %v115
    %v117 = vpop.f32.mrf.mxu0
    %118 = vmatprep.mubr.f32.mxu0 0.0
    %119 = vmatmul.mubr.f32.gmra.mxu0 %v29
    %v120 = vpop.f32.mrf.mxu0
    %v121 = vadd.f32 0.0, %v120
    %v122 = vpop.f32.mrf.mxu0
    %123 = vmatprep.mubr.f32.mxu0 0.0
    %124 = vmatmul.mubr.f32.gmra.mxu0 %v32
    %v125 = vpop.f32.mrf.mxu0
    %v126 = vadd.f32 0.0, %v125
    %v127 = vpop.f32.mrf.mxu0
    %128 = vmatprep.mubr.f32.mxu0 0.0
    %129 = vmatmul.mubr.f32.gmra.mxu0 %v35
    %v130 = vpop.f32.mrf.mxu0
    %v131 = vadd.f32 0.0, %v130
    %v132 = vpop.f32.mrf.mxu0
    %133 = vmatprep.mubr.f32.mxu0 0.0
    %134 = vmatmul.mubr.f32.gmra.mxu0 %v38
    %v135 = vpop.f32.mrf.mxu0
    %v136 = vadd.f32 0.0, %v135
    %v137 = vpop.f32.mrf.mxu0
    %138 = vmatprep.mubr.f32.mxu0 0.0
    %139 = vmatmul.mubr.f32.gmra.mxu0 %v41
    %v140 = vpop.f32.mrf.mxu0
    %v141 = vadd.f32 0.0, %v140
    %v142 = vpop.f32.mrf.mxu0
    %143 = vmatprep.mubr.f32.mxu0 0.0
    %144 = vmatmul.mubr.f32.gmra.mxu0 %v44
    %v145 = vpop.f32.mrf.mxu0
    %v146 = vadd.f32 0.0, %v145
    %v147 = vpop.f32.mrf.mxu0
    %148 = vmatprep.mubr.f32.mxu0 0.0
    %149 = vmatmul.mubr.f32.gmra.mxu0 %v47
    %v150 = vpop.f32.mrf.mxu0
    %v151 = vadd.f32 0.0, %v150
    %v152 = vpop.f32.mrf.mxu0
    %153 = vdwg.mxu0
    %v154 = vpack.c.bf16 %v121, %v116
    %v155 = vpack.c.bf16 %v131, %v126
    %v156 = vpack.c.bf16 %v141, %v136
    %v157 = vpack.c.bf16 %v151, %v146
    %v162 = vunpack.c.l.b16 %v154
    %v163 = vunpack.c.h.b16 %v154
    %v164 = vunpack.c.l.b16 %v155
    %v165 = vunpack.c.h.b16 %v155
    %v166 = vunpack.c.l.b16 %v156
    %v167 = vunpack.c.h.b16 %v156
    %v168 = vunpack.c.l.b16 %v157
    %v169 = vunpack.c.h.b16 %v157
    %v170 = vpack.c.b16 %v162, %v162
    %v171 = vpack.c.b16 %v163, %v163
    %v172 = vpack.c.b16 %v164, %v164
    %v173 = vpack.c.b16 %v165, %v165
    %v174 = vpack.c.b16 %v166, %v166
    %v175 = vpack.c.b16 %v167, %v167
    %v176 = vpack.c.b16 %v168, %v168
    %v177 = vpack.c.b16 %v169, %v169
    %186 = vst [vmem:[#allocation2] sm:$0xf] %v170
    %187 = vst [vmem:[#allocation2 + $0x4] sm:$0xf] %v171
    %188 = vst [vmem:[#allocation2 + $0x8] sm:$0xf] %v172
    %189 = vst [vmem:[#allocation2 + $0xc] sm:$0xf] %v173
    %190 = vst [vmem:[#allocation2 + $0x10] sm:$0xf] %v174
    %191 = vst [vmem:[#allocation2 + $0x14] sm:$0xf] %v175
    %192 = vst [vmem:[#allocation2 + $0x18] sm:$0xf] %v176
    %193 = vst [vmem:[#allocation2 + $0x1c] sm:$0xf] %v177
    // Predicated region
    $region10: #{tpu_custom_call.1} parent=1 // pred_check
      _
    $region11: #{tpu_custom_call.1} parent=1 // pred_check_branch
      %195 = sbr.rel (0) target = $region13
    $region12: #{tpu_custom_call.1} parent=1 // pred_region
      %s197 = ssub.s32 512, 512
      %198 = vsyncadd [#allocation3], %s197
      %s199 = sshll.u32 [#allocation2], 4
      %s200 = int_to_ptr.vmem [resolvable:$true] %s199
      %205 = dma.vmem_to_hbm [thread:$0]  %s200, 512, %s2, [#allocation3], 64, 64, 4
    $region13: #{tpu_custom_call.1} parent=1 // pred_fallthru
      _
    // Predicated region
    $region14: #{tpu_custom_call.1} parent=1 // pred_check
      _
    $region15: #{tpu_custom_call.1} parent=1 // pred_check_branch
      %207 = sbr.rel (0) target = $region17
    $region16: #{tpu_custom_call.1} parent=1 // pred_region
      %208 = dma.done [#allocation3], 512
    $region17: #{tpu_custom_call.1} parent=1 // pred_fallthru
      _
    %209 = vsyncpa [#allocation3], 1

</llo_original>
